<compile_context>
chip_gen: v5e
topology: v5e:2x2
jax: 0.10.0
libtpu: 0.0.40
codegen_flags: <defaults>
</compile_context>

<pallas_src>
import jax
import jax.numpy as jnp
from jax.experimental import pallas as pl
from jax.experimental.pallas import tpu as pltpu


def _temp_softmax_kernel(inv_t_ref, x_ref, o_ref):
    """inv_t_ref: SMEM scalar-prefetch (1,) f32 ; x_ref/o_ref: (1, TS, V) VMEM tiles."""
    x = x_ref[...].astype(jnp.float32) * inv_t_ref[0]      # temperature scaling
    m = jnp.max(x, axis=-1, keepdims=True)                  # numerically stable softmax
    e = jnp.exp(x - m)
    denom = jnp.sum(e, axis=-1, keepdims=True)
    # approx reciprocal goes to the (otherwise idle) EUP slot; one Newton step
    # restores ~f32 accuracy so results still match jax.nn.softmax tightly.
    r = pl.reciprocal(denom, approx=True)
    r = r * (2.0 - denom * r)
    o_ref[...] = (e * r).astype(o_ref.dtype)


def _pick_seq_tile(S: int, V: int, elem_bytes: int, per_tile_budget: int) -> int:
    """Largest multiple-of-8 divisor of S whose (TS, V) slab fits the byte budget."""
    if S % 8 != 0:
        # Full-extent block is always legal when it equals the array dim.
        return S
    max_rows = max(8, per_tile_budget // max(1, V * elem_bytes))
    ts = 8
    for cand in range(8, S + 1, 8):
        if S % cand == 0 and cand <= max_rows:
            ts = cand
    return ts


def gpt4_temperature_softmax(logits: jax.Array,
                             temperature: float,
                             seq_tile: int | None = None) -> jax.Array:
    """softmax(logits / temperature) over the last (vocab) axis.

    Grid is (batch, seq-tiles); each step processes a (1, TS, V) slab so the
    auto-pipeline has many steps to overlap and a full (S, V) row never has to
    fit VMEM (important for GPT-scale vocab, and for v7x's smaller VMEM).
    """
    B, S, V = logits.shape
    out_dtype = logits.dtype                      # pass-through dtype (bf16 in -> bf16 out)
    elem_bytes = jnp.dtype(logits.dtype).itemsize

    # ~3 MiB per input tile: with input+output each double-buffered that is
    # <= ~12 MiB of block buffers — safe under v5e's 16 MiB scoped default and
    # leaves lots of headroom on v6e (128 MiB) / v7x (64 MiB physical).
    per_tile_budget = 3 << 20
    TS = seq_tile if seq_tile is not None else _pick_seq_tile(S, V, elem_bytes, per_tile_budget)
    assert S % TS == 0, f"seq tile {TS} must divide S={S}"

    # Explicit VMEM budget: double-buffered input + output tiles plus headroom,
    # clamped to a range that is valid on every generation.
    out_bytes = jnp.dtype(out_dtype).itemsize
    tile_bytes = TS * V * (elem_bytes + out_bytes)
    vmem_limit = int(min(max(2 * tile_bytes + (4 << 20), 16 << 20), 48 << 20))

    inv_temp = jnp.asarray([1.0 / float(temperature)], dtype=jnp.float32)

    grid_spec = pltpu.PrefetchScalarGridSpec(
        num_scalar_prefetch=1,
        grid=(B, S // TS),
        in_specs=[
            pl.BlockSpec((1, TS, V), lambda b, s, inv_t: (b, s, 0)),
        ],
        out_specs=pl.BlockSpec((1, TS, V), lambda b, s, inv_t: (b, s, 0)),
    )

    return pl.pallas_call(
        _temp_softmax_kernel,
        out_shape=jax.ShapeDtypeStruct((B, S, V), out_dtype),
        grid_spec=grid_spec,
        compiler_params=pltpu.CompilerParams(
            dimension_semantics=("parallel", "parallel"),
            vmem_limit_bytes=vmem_limit,
        ),
    )(inv_temp, logits)


if __name__ == "__main__":
    temperature = 0.7
    key = jax.random.PRNGKey(0)

    # Case 1: tiny shapes consistent with the module's "sampling" semantics.
    B, S, V = 2, 8, 128
    k1, k2 = jax.random.split(key)
    logits = jax.random.normal(k1, (B, S, V), dtype=jnp.float32)
    probs = jax.block_until_ready(gpt4_temperature_softmax(logits, temperature))
    ref = jax.nn.softmax(logits / temperature, axis=-1)
    assert probs.shape == (B, S, V)
    assert jnp.allclose(probs, ref, atol=1e-5, rtol=1e-5)
    assert jnp.allclose(jnp.sum(probs, axis=-1), 1.0, atol=1e-5)

    # Case 2: exercise the S-tiled multi-step grid (grid=(B, S//TS) with TS=8).
    B2, S2, V2 = 2, 32, 128
    logits2 = jax.random.normal(k2, (B2, S2, V2), dtype=jnp.float32)
    probs2 = jax.block_until_ready(
        gpt4_temperature_softmax(logits2, temperature, seq_tile=8))
    ref2 = jax.nn.softmax(logits2 / temperature, axis=-1)
    assert probs2.shape == (B2, S2, V2)
    assert jnp.allclose(probs2, ref2, atol=1e-5, rtol=1e-5)
    assert jnp.allclose(jnp.sum(probs2, axis=-1), 1.0, atol=1e-5)

    print("KERNEL_OK")
</pallas_src>

<mosaic_0001>
module attributes {stable_mosaic.version = 11 : i64} {
  func.func @_temp_softmax_kernel(%arg0: i32, %arg1: i32, %arg2: memref<1xf32, #tpu.memory_space<smem>>, %arg3: memref<1x8x128xf32, #tpu.memory_space<vmem>>, %arg4: memref<1x8x128xf32, #tpu.memory_space<vmem>>) attributes {dimension_semantics = [#tpu.dimension_semantics<parallel>, #tpu.dimension_semantics<parallel>], iteration_bounds = array<i64: 2, 1>, scalar_prefetch = 1 : i64, scratch_operands = 0 : i64, tpu.core_type = #tpu.core_type<tc>, window_params = [{transform_indices = @transform_0, window_bounds = array<i64: 1, 8, 128>}, {transform_indices = @transform_1, window_bounds = array<i64: 1, 8, 128>}]} {
    %c0 = arith.constant 0 : index
    %c0_0 = arith.constant 0 : index
    %c0_1 = arith.constant 0 : index
    %0 = vector.load %arg3[%c0, %c0_0, %c0_1] : memref<1x8x128xf32, #tpu.memory_space<vmem>>, vector<1x8x128xf32>
    %c0_2 = arith.constant 0 : index
    %1 = memref.load %arg2[%c0_2] : memref<1xf32, #tpu.memory_space<smem>>
    %2 = vector.broadcast %1 : f32 to vector<1x8x128xf32>
    %3 = arith.mulf %0, %2 : vector<1x8x128xf32>
    %cst = arith.constant dense<0xFF800000> : vector<1x8xf32>
    %4 = vector.multi_reduction <maximumf>, %3, %cst [2] : vector<1x8x128xf32> to vector<1x8xf32>
    %5 = vector.shape_cast %4 : vector<1x8xf32> to vector<1x8x1xf32>
    %6 = vector.broadcast %5 : vector<1x8x1xf32> to vector<1x8x128xf32>
    %7 = arith.subf %3, %6 : vector<1x8x128xf32>
    %8 = math.exp %7 : vector<1x8x128xf32>
    %cst_3 = arith.constant dense<0.000000e+00> : vector<1x8xf32>
    %9 = vector.multi_reduction <add>, %8, %cst_3 [2] : vector<1x8x128xf32> to vector<1x8xf32>
    %10 = vector.shape_cast %9 : vector<1x8xf32> to vector<1x8x1xf32>
    %11 = tpu.reciprocal %10 {approx = true} : vector<1x8x1xf32> -> vector<1x8x1xf32>
    %12 = arith.mulf %10, %11 : vector<1x8x1xf32>
    %cst_4 = arith.constant 2.000000e+00 : f32
    %13 = vector.broadcast %cst_4 : f32 to vector<1x8x1xf32>
    %14 = arith.subf %13, %12 : vector<1x8x1xf32>
    %15 = arith.mulf %11, %14 : vector<1x8x1xf32>
    %16 = vector.broadcast %15 : vector<1x8x1xf32> to vector<1x8x128xf32>
    %17 = arith.mulf %8, %16 : vector<1x8x128xf32>
    %c0_5 = arith.constant 0 : index
    %c0_6 = arith.constant 0 : index
    %c0_7 = arith.constant 0 : index
    %18 = vector.load %arg4[%c0_5, %c0_6, %c0_7] : memref<1x8x128xf32, #tpu.memory_space<vmem>>, vector<1x8x128xf32>
    tpu.vector_store %arg4[%c0_5, %c0_6, %c0_7], %17 {strides = array<i32>} : memref<1x8x128xf32, #tpu.memory_space<vmem>>, vector<1x8x128xf32>,
    return
  }
  func.func @transform_0(%arg0: i32, %arg1: i32, %arg2: memref<1xf32, #tpu.memory_space<smem>>) -> (i32, i32, i32) {
    %c0_i32 = arith.constant 0 : i32
    %c0_i32_0 = arith.constant 0 : i32
    return %arg0, %arg1, %c0_i32 : i32, i32, i32
  }
  func.func @transform_1(%arg0: i32, %arg1: i32, %arg2: memref<1xf32, #tpu.memory_space<smem>>) -> (i32, i32, i32) {
    %c0_i32 = arith.constant 0 : i32
    %c0_i32_0 = arith.constant 0 : i32
    return %arg0, %arg1, %c0_i32 : i32, i32, i32
  }
}

</mosaic_0001>

<llo_original>
// kernel: tpu_custom_call.1
$region0: #{tpu_custom_call.1}
  #allocation0 [shape = 'u32[]', space=smem, size = 0x4, offset = 0x4, fixed_abs, tag = 'smem constant byte address 0x4 - core index']
  #allocation1 [shape = 'u32[72,128]{1,0:T(1,128)}', space=vmem, size = 0x9000, scoped, tag = 'internal scratch']
  #allocation2 [shape = 's32[1]{0}', space=sflag, size = 0x4, scoped, tag = 'scoped memory for tpu_custom_call.1']
  #allocation3 [shape = 'f32[1]{0:T(128)S(6)}', space=smem, size = 0x200, scoped, tag = 'prefetched SMEM operand 0']
  %s0 = inlined_call_operand.<no memory space> [shape: f32[1], index: 0, kind: input, shape index: {}]
  %s1 = inlined_call_operand.hbm [shape: f32[2,8,128], index: 1, kind: input, shape index: {}]
  %s2 = inlined_call_operand.hbm [shape: f32[2,8,128], index: 2, kind: output, shape index: {}]
  %s3 = sld [smem:[#allocation0]]
  $region41: #{tpu_custom_call.1} parent=0
    _
  %s5 = ssub.s32 1, %s3
  %s6 = scalar_select 0, %s5, %s3
  %7 = sst [smem:[#allocation3]] %s0
  $region1: #{tpu_custom_call.1} parent=0
    #allocation4 [shape = 'u8[8192]{0}', space=vmem, size = 0x2000, scoped, tag = 'input window, operand 1']
    #allocation5 [shape = 's32[2]{0}', space=sflag, size = 0x8, scoped, tag = 'scoped memory for tpu_custom_call.1']
    #allocation6 [shape = 's32[2]{0}', space=sflag, size = 0x8, scoped, tag = 'scoped memory for tpu_custom_call.1']
    #allocation7 [shape = 'u8[8192]{0}', space=vmem, size = 0x2000, scoped, tag = 'output window, operand 0']
    %8 = vsyncpa [#allocation5], 0
    %s9 = scalar_lea.sflag [#allocation5], 1
    %10 = vsyncpa %s9, 0
    %11 = vsyncpa [#allocation6], 0
    %s12 = scalar_lea.sflag [#allocation6], 1
    %13 = vsyncpa %s12, 0
    loop: start=0, step=1, limit=4
    $region2: #{tpu_custom_call.1} parent=1 // loop_pre_header
      _
    $region3: #{tpu_custom_call.1} parent=1 // loop_header
      %s15 = sphi 0, %s19
      %p16 = scmp.ge.s32.totalorder %s15, 4
      %s22 = sphi 0, %s34
      %s23 = sphi 0, %s30
      %s24 = sphi 0, %s22
      %s25 = sphi 0, %s23
      %s26 = sphi 0, %s24
      %s27 = sphi 0, %s25
      %s39 = sphi 0, %s41
      %s42 = sphi 0, %s39
      %s43 = sphi 0, %s42
      %s59 = sphi 0, %s43
      %s67 = sphi 0, %s69
      %s70 = sphi 0, %s67
      %s71 = sphi 0, %s70
      %s87 = sphi 0, %s71
    $region4: #{tpu_custom_call.1} parent=1 // loop_header_branch
      %18 = sbr.rel (%p16) target = $region8
    $region5: #{tpu_custom_call.1} parent=1 // loop_body
      %s20 = ssub.s32 %s15, 1
      %s21 = ssub.s32 %s15, 2
      %s28 = sadd.s32 1, %s23
      %p29 = scmp.ge.s32.totalorder %s28, 1
      %s30 = scalar_select %p29, 0, %s28
      %s31 = sadd.s32 1, %s22
      %s32 = scalar_select %p29, %s31, %s22
      %p33 = scmp.ge.s32.totalorder %s32, 2
      %s34 = scalar_select %p33, 0, %s32
      %s35 = ssub.s32 %s22, %s34
      %s36 = ssub.s32 %s23, %s30
      %s37 = sor.u32 %s35, %s36
      %p38 = scmp.eq.s32.totalorder %s37, 0
      %s40 = sadd.s32 %s39, 1
      %s41 = scalar_select %p38, %s39, %s40
      %p44 = pneg %p38
      %p45 = scmp.eq.s32.totalorder %s15, 1
      %p46 = por %p44, %p45
      %p47 = scmp.ne.s32.totalorder %s39, %s42
      %p48 = scmp.eq.s32.totalorder %s15, 0
      %p49 = por %p47, %p48
      %p50 = scmp.ne.s32.totalorder %s39, %s42
      %p51 = scmp.eq.s32.totalorder %s20, 1
      %p52 = por %p50, %p51
      %p53 = scmp.ne.s32.totalorder %s42, %s43
      %p54 = scmp.eq.s32.totalorder %s20, 0
      %p55 = por %p53, %p54
      %p56 = scmp.ne.s32.totalorder %s42, %s43
      %p57 = scmp.eq.s32.totalorder %s21, 1
      %p58 = por %p56, %p57
      %p60 = scmp.ne.s32.totalorder %s43, %s59
      %p61 = scmp.eq.s32.totalorder %s21, 0
      %p62 = por %p60, %p61
      %s63 = ssub.s32 %s22, %s34
      %s64 = ssub.s32 %s23, %s30
      %s65 = sor.u32 %s63, %s64
      %p66 = scmp.eq.s32.totalorder %s65, 0
      %s68 = sadd.s32 %s67, 1
      %s69 = scalar_select %p66, %s67, %s68
      %p72 = pneg %p66
      %p73 = scmp.eq.s32.totalorder %s15, 1
      %p74 = por %p72, %p73
      %p75 = scmp.ne.s32.totalorder %s67, %s70
      %p76 = scmp.eq.s32.totalorder %s15, 0
      %p77 = por %p75, %p76
      %p78 = scmp.ne.s32.totalorder %s67, %s70
      %p79 = scmp.eq.s32.totalorder %s20, 1
      %p80 = por %p78, %p79
      %p81 = scmp.ne.s32.totalorder %s70, %s71
      %p82 = scmp.eq.s32.totalorder %s20, 0
      %p83 = por %p81, %p82
      %p84 = scmp.ne.s32.totalorder %s70, %s71
      %p85 = scmp.eq.s32.totalorder %s21, 1
      %p86 = por %p84, %p85
      %p88 = scmp.ne.s32.totalorder %s71, %s87
      %p89 = scmp.eq.s32.totalorder %s21, 0
      %p90 = por %p88, %p89
      %p91 = scmp.le.s32.totalorder 1, %s15
      %p92 = scmp.lt.s32.totalorder %s15, 3
      %p93 = pnand %p91, %p92
      %p94 = pneg %p93
      // Predicated region
      $region9: #{tpu_custom_call.1} parent=5 // pred_check
        _
      $region10: #{tpu_custom_call.1} parent=5 // pred_check_branch
        %96 = sbr.rel (%p93) target = $region12
      $region11: #{tpu_custom_call.1} parent=5 // pred_region
        %s97 = ssub.s32 %s15, 1
      $region12: #{tpu_custom_call.1} parent=5 // pred_fallthru
        _
      %p98 = scmp.lt.s32.totalorder %s15, 2
      // Predicated region
      $region13: #{tpu_custom_call.1} parent=5 // pred_check
        %p99 = pneg %p98
      $region14: #{tpu_custom_call.1} parent=5 // pred_check_branch
        %101 = sbr.rel (%p99) target = $region16
      $region15: #{tpu_custom_call.1} parent=5 // pred_region
        // Predicated region
        $region17: #{tpu_custom_call.1} parent=15 // pred_check
          %p102 = pneg %p49
        $region18: #{tpu_custom_call.1} parent=15 // pred_check_branch
          %104 = sbr.rel (%p102) target = $region20
        $region19: #{tpu_custom_call.1} parent=15 // pred_region
          %s105 = sand.u32 %s39, 1
          %s106 = scalar_lea.sflag [#allocation5], %s105
          %s107 = sand.u32 %s39, 1
          %s108 = smul.addr %s107, 8
          %s109 = scalar_lea.vmem [#allocation4], %s108
          %111 = vsyncadd %s106, 0
          %s112 = sadd.s32 %s23, %s22
          %s113 = smul.addr %s112, 8
          %s114 = scalar_lea.hbm %s1, %s113
          %s116 = sshll.u32 %s114, 4
          %s117 = int_to_ptr.hbm [resolvable:$true] %s116
          %s118 = sshll.u32 %s109, 4
          %s119 = int_to_ptr.vmem [resolvable:$true] %s118
          %121 = dma.hbm_to_vmem [thread:$0]  %s117, 128, %s119, %s106
        $region20: #{tpu_custom_call.1} parent=15 // pred_fallthru
          _
      $region16: #{tpu_custom_call.1} parent=5 // pred_fallthru
        _
      %p122 = scmp.le.s32.totalorder 1, %s15
      %p123 = scmp.lt.s32.totalorder %s15, 3
      %p124 = pnand %p122, %p123
      %p125 = pneg %p124
      // Predicated region
      $region21: #{tpu_custom_call.1} parent=5 // pred_check
        _
      $region22: #{tpu_custom_call.1} parent=5 // pred_check_branch
        %127 = sbr.rel (%p124) target = $region24
      $region23: #{tpu_custom_call.1} parent=5 // pred_region
        %s128 = ssub.s32 %s15, 1
        %s129 = sand.u32 %s42, 1
        %s130 = scalar_lea.sflag [#allocation5], %s129
        %s131 = sand.u32 %s42, 1
        %s132 = smul.addr %s131, 8
        %s133 = scalar_lea.vmem [#allocation4], %s132
        // Predicated region
        $region25: #{tpu_custom_call.1} parent=23 // pred_check
          %p134 = pneg %p55
        $region26: #{tpu_custom_call.1} parent=23 // pred_check_branch
          %136 = sbr.rel (%p134) target = $region28
        $region27: #{tpu_custom_call.1} parent=23 // pred_region
          %138 = dma.done %s130, 128
        $region28: #{tpu_custom_call.1} parent=23 // pred_fallthru
          _
        %s139 = sand.u32 %s42, 1
        %s140 = scalar_lea.sflag [#allocation5], %s139
        %s141 = sand.u32 %s42, 1
        %s142 = smul.addr %s141, 8
        %s143 = scalar_lea.vmem [#allocation4], %s142
        %p144 = pneg %p55
        %p145 = pneg %p52
        %p146 = pneg %p83
        %p147 = pneg %p80
        %s148 = sand.u32 %s70, 1
        %s149 = scalar_lea.sflag [#allocation6], %s148
        %s150 = sand.u32 %s70, 1
        %s151 = smul.addr %s150, 8
        %s152 = scalar_lea.vmem [#allocation7], %s151
        %v153 = vld [vmem:[%s133] sm:$0xff]
        %s154 = sld [smem:[#allocation3]]
        %v155 = vstv %s154
        %v156 = vmul.f32 %v153, %v155
        %157 = vmax.xlane.f32.xlu0 %v156
        %v158 = vpop.xlane.xlu0 %157
        %v159 = vsub.f32 %v156, %v158
        %v160 = vmul.f32 %v159, 1.442695
        %v161 = vpow.pop %v160
        %162 = vadd.xlane.f32.xlu0 %v161
        %v163 = vpop.xlane.xlu0 %162
        %v164 = vrcp.pop %v163
        %v165 = vmul.f32 %v163, %v164
        %v166 = vsub.f32 2.0, %v165
        %v167 = vmul.f32 %v164, %v166
        %v168 = vmul.f32 %v161, %v167
        %169 = vst [vmem:[%s152] sm:$0xff] %v168
        %s170 = sand.u32 %s70, 1
        %s171 = scalar_lea.sflag [#allocation6], %s170
        %s172 = sand.u32 %s70, 1
        %s173 = smul.addr %s172, 8
        %s174 = scalar_lea.vmem [#allocation7], %s173
        // Predicated region
        $region29: #{tpu_custom_call.1} parent=23 // pred_check
          %p175 = pneg %p80
        $region30: #{tpu_custom_call.1} parent=23 // pred_check_branch
          %177 = sbr.rel (%p175) target = $region32
        $region31: #{tpu_custom_call.1} parent=23 // pred_region
          %179 = vsyncadd %s171, 0
          %s180 = sadd.s32 %s25, %s24
          %s181 = smul.addr %s180, 8
          %s182 = scalar_lea.hbm %s2, %s181
          %s184 = sshll.u32 %s174, 4
          %s185 = int_to_ptr.vmem [resolvable:$true] %s184
          %s186 = sshll.u32 %s182, 4
          %s187 = int_to_ptr.hbm [resolvable:$true] %s186
          %189 = dma.vmem_to_hbm [thread:$0]  %s185, 128, %s187, %s171
        $region32: #{tpu_custom_call.1} parent=23 // pred_fallthru
          _
      $region24: #{tpu_custom_call.1} parent=5 // pred_fallthru
        _
      %p190 = scmp.le.s32.totalorder 2, %s15
      // Predicated region
      $region33: #{tpu_custom_call.1} parent=5 // pred_check
        %p191 = pneg %p190
      $region34: #{tpu_custom_call.1} parent=5 // pred_check_branch
        %193 = sbr.rel (%p191) target = $region36
      $region35: #{tpu_custom_call.1} parent=5 // pred_region
        %s194 = ssub.s32 %s15, 2
        // Predicated region
        $region37: #{tpu_custom_call.1} parent=35 // pred_check
          %p195 = pneg %p86
        $region38: #{tpu_custom_call.1} parent=35 // pred_check_branch
          %197 = sbr.rel (%p195) target = $region40
        $region39: #{tpu_custom_call.1} parent=35 // pred_region
          %s198 = sand.u32 %s71, 1
          %s199 = scalar_lea.sflag [#allocation6], %s198
          %s200 = sand.u32 %s71, 1
          %s201 = smul.addr %s200, 8
          %s202 = scalar_lea.vmem [#allocation7], %s201
          %204 = dma.done %s199, 128
        $region40: #{tpu_custom_call.1} parent=35 // pred_fallthru
          _
      $region36: #{tpu_custom_call.1} parent=5 // pred_fallthru
        _
    $region6: #{tpu_custom_call.1} parent=1 // loop_footer
      %s19 = sadd.s32 1, %s15
    $region7: #{tpu_custom_call.1} parent=1 // loop_footer_branch
      %14 = sbr.rel target = $region3
    $region8: #{tpu_custom_call.1} parent=1 // loop_exit
      _
    %205 = vsyncpa [#allocation5], 1
    %s206 = scalar_lea.sflag [#allocation5], 1
    %207 = vsyncpa %s206, 1
    %208 = vsyncpa [#allocation6], 1
    %s209 = scalar_lea.sflag [#allocation6], 1
    %210 = vsyncpa %s209, 1

</llo_original>
